<compile_context>
chip_gen: v6e
topology: v6e:2x2x1
jax: 0.10.0
libtpu: 0.0.40
codegen_flags: <defaults>
</compile_context>

<pallas_src>
import functools

import jax
import jax.numpy as jnp
import numpy as np
from jax import lax
from jax.experimental import pallas as pl
from jax.experimental.pallas import tpu as pltpu


# ----------------------------- Pallas kernel ------------------------------ #
def _convgru_kernel(col_ref, w_ref, h_ref, o_ref, *, Ch):
    """One (batch, spatial-tile) grid point.

    col_ref : (1, Ckk, T)   im2col'd [x taps ; h taps ; zero pad]
    w_ref   : (4*Ch, Ckk)   fused gate weights, rows = [r | z | n_x | n_h]
    h_ref   : (1, Ch, T)    previous hidden state (channels-major), f32
    o_ref   : (1, Ch, T)    new hidden state h_t, f32
    """
    # Single fused MXU matmul: (4*Ch, Ckk) @ (Ckk, T) -> (4*Ch, T), f32 acc.
    acts = jnp.dot(w_ref[...], col_ref[0],
                   preferred_element_type=jnp.float32)

    # Gate elementwise math in f32 on lane-dense (Ch, T) tiles (static,
    # sublane-aligned slices for Ch a multiple of 8).
    r = jax.nn.sigmoid(acts[0 * Ch:1 * Ch])            # reset   (rx + rh)
    z = jax.nn.sigmoid(acts[1 * Ch:2 * Ch])            # update  (zx + zh)
    n = jnp.tanh(acts[2 * Ch:3 * Ch] + r * acts[3 * Ch:4 * Ch])
    o_ref[0] = (1.0 - z) * n + z * h_ref[0]


# --------------------------- wrapper-side layout --------------------------- #
def _im2col_nchw(a_nchw, K, p):
    """(B, C, H, W) -> (B, K*K*C, H*W); contraction ordered (ky, kx, c)."""
    B, C, H, W = a_nchw.shape
    ap = jnp.pad(a_nchw, ((0, 0), (0, 0), (p, p), (p, p)))
    taps = [ap[:, :, ky:ky + H, kx:kx + W]
            for ky in range(K) for kx in range(K)]
    col = jnp.stack(taps, axis=1)                      # (B, K*K, C, H, W)
    return col.reshape(B, K * K * C, H * W)


def _fuse_gate_weights(wx_hwio, wh_hwio, Ch, Ckk_pad):
    """Build the (4*Ch, Ckk_pad) fused weight matrix.

    Row blocks (outputs): [reset | update | new_x | new_h].
    Col blocks (contraction): [x taps (K*K*Cin) | h taps (K*K*Ch) | 0 pad].
    reset/update rows carry BOTH x and h taps so rx+rh / zx+zh happen inside
    the matmul accumulation.
    """
    K, _, Cin, _ = wx_hwio.shape
    KKx, KKh = K * K * Cin, K * K * Ch
    wx = wx_hwio.reshape(KKx, 3 * Ch)      # rows ordered (ky, kx, cin)
    wh = wh_hwio.reshape(KKh, 3 * Ch)
    W = jnp.zeros((4 * Ch, Ckk_pad), jnp.float32)
    W = W.at[0 * Ch:1 * Ch, :KKx].set(wx[:, 0 * Ch:1 * Ch].T)           # r_x
    W = W.at[0 * Ch:1 * Ch, KKx:KKx + KKh].set(wh[:, 0 * Ch:1 * Ch].T)  # r_h
    W = W.at[1 * Ch:2 * Ch, :KKx].set(wx[:, 1 * Ch:2 * Ch].T)           # z_x
    W = W.at[1 * Ch:2 * Ch, KKx:KKx + KKh].set(wh[:, 1 * Ch:2 * Ch].T)  # z_h
    W = W.at[2 * Ch:3 * Ch, :KKx].set(wx[:, 2 * Ch:3 * Ch].T)           # n_x
    W = W.at[3 * Ch:4 * Ch, KKx:KKx + KKh].set(wh[:, 2 * Ch:3 * Ch].T)  # n_h
    return W


def _pick_spatial_tile(HW):
    """Largest multiple-of-128 divisor of HW, capped at 2048 (lane-dense)."""
    for t in (2048, 1024, 512, 256, 128):
        if t <= HW and HW % t == 0:
            return t
    return HW   # small/odd spatial size: one full-extent tile


# ------------------------------- entry point ------------------------------- #
@functools.partial(jax.jit, static_argnames=("K", "compute_dtype"))
def convgru_cell(x_nchw, h_nchw, wx_hwio, wh_hwio, K,
                 compute_dtype=jnp.bfloat16):
    """x: (B, Cin, H, W), h: (B, Ch, H, W) -> h_t: (B, Ch, H, W)  (all NCHW)."""
    B, Cin, H, W = x_nchw.shape
    Ch = h_nchw.shape[1]
    p = K // 2
    HW = H * W
    KKC = K * K * (Cin + Ch)
    # Padded contraction depth: >=128, multiple of 16 (bf16 sublane packing;
    # also satisfies the f32 multiple-of-8 layout).
    Ckk = max(128, ((KKC + 15) // 16) * 16)

    # Layout-only prep, done directly in the compute dtype (one pass, replaces
    # 18 in-kernel strided relayouts; halves prep HBM traffic on bf16 path).
    # TODO(synk): at very large H*W the 9x im2col blowup could be replaced by
    # in-kernel pltpu.roll-based halo shifts.
    xcol = _im2col_nchw(x_nchw.astype(compute_dtype), K, p)  # (B, KK*Cin, HW)
    hcol = _im2col_nchw(h_nchw.astype(compute_dtype), K, p)  # (B, KK*Ch,  HW)
    col = jnp.concatenate([xcol, hcol], axis=1)              # (B, KKC, HW)
    col = jnp.pad(col, ((0, 0), (0, Ckk - KKC), (0, 0)))

    w_mat = _fuse_gate_weights(wx_hwio.astype(jnp.float32),
                               wh_hwio.astype(jnp.float32),
                               Ch, Ckk).astype(compute_dtype)
    h_flat = h_nchw.reshape(B, Ch, HW).astype(jnp.float32)   # f32 blend input

    T = _pick_spatial_tile(HW)
    grid = (B, HW // T)

    itm = jnp.dtype(compute_dtype).itemsize
    cost = pl.CostEstimate(
        flops=2 * B * HW * Ckk * 4 * Ch + 10 * B * Ch * HW,
        transcendentals=3 * B * Ch * HW,
        bytes_accessed=(B * Ckk * HW * itm + 4 * Ch * Ckk * itm
                        + 2 * B * Ch * HW * 4),
    )

    out = pl.pallas_call(
        functools.partial(_convgru_kernel, Ch=Ch),
        out_shape=jax.ShapeDtypeStruct((B, Ch, HW), jnp.float32),
        grid=grid,
        in_specs=[
            pl.BlockSpec((1, Ckk, T), lambda b, t: (b, 0, t)),       # col
            pl.BlockSpec((4 * Ch, Ckk), lambda b, t: (0, 0)),        # weights
            pl.BlockSpec((1, Ch, T), lambda b, t: (b, 0, t)),        # h_prev
        ],
        out_specs=pl.BlockSpec((1, Ch, T), lambda b, t: (b, 0, t)),
        compiler_params=pltpu.CompilerParams(
            dimension_semantics=("parallel", "parallel")),
        cost_estimate=cost,
    )(col, w_mat, h_flat)

    return out.reshape(B, Ch, H, W)


# --------------------- parameter init (plain-JAX glue) --------------------- #
def _spectral_normalize(w_hwio, key, n_power_iterations=1, eps=1e-12):
    """PyTorch-style spectral norm: divide by the largest singular value of
    the (Cout, Cin*K*K) weight matrix, estimated with power iteration."""
    cout = w_hwio.shape[-1]
    wmat = jnp.transpose(w_hwio, (3, 2, 0, 1)).reshape(cout, -1)
    u = jax.random.normal(key, (cout,), jnp.float32)
    u = u / (jnp.linalg.norm(u) + eps)
    v = None
    for _ in range(n_power_iterations):
        v = wmat.T @ u
        v = v / (jnp.linalg.norm(v) + eps)
        u = wmat @ v
        u = u / (jnp.linalg.norm(u) + eps)
    sigma = u @ (wmat @ v)
    return w_hwio / sigma


def make_gate_weight(key, K, cin, cout, sqrt_k):
    kw, ku = jax.random.split(key)
    w = jax.random.uniform(kw, (K, K, cin, cout), jnp.float32, -sqrt_k, sqrt_k)
    return _spectral_normalize(w, ku)


# ------------------------- pure-JAX reference check ------------------------ #
def convgru_ref(x_nchw, h_nchw, wx_hwio, wh_hwio, Ch):
    conv = lambda a, w: lax.conv_general_dilated(
        a, w, (1, 1), 'SAME', dimension_numbers=('NCHW', 'HWIO', 'NCHW'))
    gx = conv(x_nchw, wx_hwio)          # (B, 3*Ch, H, W)
    gh = conv(h_nchw, wh_hwio)
    rx, zx, nx = gx[:, :Ch], gx[:, Ch:2 * Ch], gx[:, 2 * Ch:]
    rh, zh, nh = gh[:, :Ch], gh[:, Ch:2 * Ch], gh[:, 2 * Ch:]
    r = jax.nn.sigmoid(rx + rh)
    z = jax.nn.sigmoid(zx + zh)
    n = jnp.tanh(nx + r * nh)
    return (1.0 - z) * n + z * h_nchw


# ---------------------------------- main ----------------------------------- #
if __name__ == "__main__":
    B, x_dim, h_dim, H, W, K = 2, 4, 8, 16, 16, 3
    sqrt_k = float(np.sqrt(1.0 / h_dim))

    root = jax.random.PRNGKey(0)
    kx, kh, k_rx, k_rh, k_zx, k_zh, k_nx, k_nh = jax.random.split(root, 8)

    # Inputs.  NOTE: the reference forward's `prev_state is None` branch is
    # buggy (uses undefined self.cs_dim); prev_state is passed explicitly.
    x = jax.random.normal(kx, (B, x_dim, H, W), jnp.float32)
    h_zero = jnp.zeros((B, h_dim, H, W), jnp.float32)
    h_rand = jax.random.normal(kh, (B, h_dim, H, W), jnp.float32)

    # Six spectrally-normalized conv weights, stacked as [reset|update|new].
    w_rx = make_gate_weight(k_rx, K, x_dim, h_dim, sqrt_k)
    w_zx = make_gate_weight(k_zx, K, x_dim, h_dim, sqrt_k)
    w_nx = make_gate_weight(k_nx, K, x_dim, h_dim, sqrt_k)
    w_rh = make_gate_weight(k_rh, K, h_dim, h_dim, sqrt_k)
    w_zh = make_gate_weight(k_zh, K, h_dim, h_dim, sqrt_k)
    w_nh = make_gate_weight(k_nh, K, h_dim, h_dim, sqrt_k)
    wx = jnp.concatenate([w_rx, w_zx, w_nx], axis=-1)   # (K, K, x_dim, 3*h_dim)
    wh = jnp.concatenate([w_rh, w_zh, w_nh], axis=-1)   # (K, K, h_dim, 3*h_dim)

    h_t = None
    for h0 in (h_zero, h_rand):
        h_ref = jax.block_until_ready(convgru_ref(x, h0, wx, wh, h_dim))

        # Strict structural check: f32 compute path.
        h_f32 = jax.block_until_ready(
            convgru_cell(x, h0, wx, wh, K=K, compute_dtype=jnp.float32))
        np.testing.assert_allclose(np.asarray(h_f32), np.asarray(h_ref),
                                   rtol=1e-4, atol=1e-4)

        # Fast path: bf16 matmul operands, f32 accumulation + f32 gate math.
        h_t = jax.block_until_ready(
            convgru_cell(x, h0, wx, wh, K=K, compute_dtype=jnp.bfloat16))
        np.testing.assert_allclose(np.asarray(h_t), np.asarray(h_ref),
                                   rtol=3e-2, atol=3e-2)

    assert h_t.shape == (B, h_dim, H, W)
    print("KERNEL_OK")
</pallas_src>

<mosaic_0001>
module attributes {stable_mosaic.version = 11 : i64} {
  func.func @_convgru_kernel(%arg0: i32, %arg1: i32, %arg2: memref<1x128x256xf32, #tpu.memory_space<vmem>>, %arg3: memref<32x128xf32, #tpu.memory_space<vmem>>, %arg4: memref<1x8x256xf32, #tpu.memory_space<vmem>>, %arg5: memref<1x8x256xf32, #tpu.memory_space<vmem>>) attributes {dimension_semantics = [#tpu.dimension_semantics<parallel>, #tpu.dimension_semantics<parallel>], iteration_bounds = array<i64: 2, 1>, scalar_prefetch = 0 : i64, scratch_operands = 0 : i64, tpu.core_type = #tpu.core_type<tc>, window_params = [{transform_indices = @transform_0, window_bounds = array<i64: 1, 128, 256>}, {pipeline_mode = #tpu.pipeline_mode<synchronous>, transform_indices = @transform_1, window_bounds = array<i64: 32, 128>}, {transform_indices = @transform_2, window_bounds = array<i64: 1, 8, 256>}, {transform_indices = @transform_3, window_bounds = array<i64: 1, 8, 256>}]} {
    %c0 = arith.constant 0 : index
    %c0_0 = arith.constant 0 : index
    %0 = vector.load %arg3[%c0, %c0_0] : memref<32x128xf32, #tpu.memory_space<vmem>>, vector<32x128xf32>
    %c0_1 = arith.constant 0 : index
    %c0_2 = arith.constant 0 : index
    %c0_3 = arith.constant 0 : index
    %1 = vector.load %arg2[%c0_1, %c0_2, %c0_3] : memref<1x128x256xf32, #tpu.memory_space<vmem>>, vector<1x128x256xf32>
    %2 = vector.shape_cast %1 : vector<1x128x256xf32> to vector<128x256xf32>
    %cst = arith.constant dense<0.000000e+00> : vector<32x256xf32>
    %3 = tpu.matmul %0, %2, %cst {dimension_numbers = #tpu.dot_dimension_numbers<[1], [0], [0], [1], [0, 0, 1, 1], [], []>} : vector<32x128xf32>, vector<128x256xf32>, vector<32x256xf32> -> vector<32x256xf32>
    %4 = vector.extract_strided_slice %3 {offsets = [0, 0], sizes = [8, 256], strides = [1, 1]} : vector<32x256xf32> to vector<8x256xf32>
    %5 = arith.negf %4 : vector<8x256xf32>
    %6 = math.exp %5 : vector<8x256xf32>
    %cst_4 = arith.constant 1.000000e+00 : f32
    %7 = vector.broadcast %cst_4 : f32 to vector<8x256xf32>
    %8 = arith.addf %7, %6 : vector<8x256xf32>
    %9 = arith.divf %7, %8 : vector<8x256xf32>
    %10 = vector.extract_strided_slice %3 {offsets = [8, 0], sizes = [8, 256], strides = [1, 1]} : vector<32x256xf32> to vector<8x256xf32>
    %11 = arith.negf %10 : vector<8x256xf32>
    %12 = math.exp %11 : vector<8x256xf32>
    %cst_5 = arith.constant 1.000000e+00 : f32
    %13 = vector.broadcast %cst_5 : f32 to vector<8x256xf32>
    %14 = arith.addf %13, %12 : vector<8x256xf32>
    %15 = arith.divf %13, %14 : vector<8x256xf32>
    %16 = vector.extract_strided_slice %3 {offsets = [16, 0], sizes = [8, 256], strides = [1, 1]} : vector<32x256xf32> to vector<8x256xf32>
    %17 = vector.extract_strided_slice %3 {offsets = [24, 0], sizes = [8, 256], strides = [1, 1]} : vector<32x256xf32> to vector<8x256xf32>
    %18 = arith.mulf %9, %17 : vector<8x256xf32>
    %19 = arith.addf %16, %18 : vector<8x256xf32>
    %20 = math.tanh %19 : vector<8x256xf32>
    %cst_6 = arith.constant 1.000000e+00 : f32
    %21 = vector.broadcast %cst_6 : f32 to vector<8x256xf32>
    %22 = arith.subf %21, %15 : vector<8x256xf32>
    %23 = arith.mulf %22, %20 : vector<8x256xf32>
    %c0_7 = arith.constant 0 : index
    %c0_8 = arith.constant 0 : index
    %c0_9 = arith.constant 0 : index
    %24 = vector.load %arg4[%c0_7, %c0_8, %c0_9] : memref<1x8x256xf32, #tpu.memory_space<vmem>>, vector<1x8x256xf32>
    %25 = vector.shape_cast %24 : vector<1x8x256xf32> to vector<8x256xf32>
    %26 = arith.mulf %15, %25 : vector<8x256xf32>
    %27 = arith.addf %23, %26 : vector<8x256xf32>
    %c0_10 = arith.constant 0 : index
    %c0_11 = arith.constant 0 : index
    %c0_12 = arith.constant 0 : index
    %28 = vector.load %arg5[%c0_10, %c0_11, %c0_12] : memref<1x8x256xf32, #tpu.memory_space<vmem>>, vector<1x8x256xf32>
    %29 = vector.shape_cast %28 : vector<1x8x256xf32> to vector<8x256xf32>
    %30 = vector.shape_cast %27 : vector<8x256xf32> to vector<1x8x256xf32>
    tpu.vector_store %arg5[%c0_10, %c0_11, %c0_12], %30 {strides = array<i32>} : memref<1x8x256xf32, #tpu.memory_space<vmem>>, vector<1x8x256xf32>,
    return
  }
  func.func @transform_0(%arg0: i32, %arg1: i32) -> (i32, i32, i32) {
    %c0_i32 = arith.constant 0 : i32
    %c0_i32_0 = arith.constant 0 : i32
    return %arg0, %c0_i32, %arg1 : i32, i32, i32
  }
  func.func @transform_1(%arg0: i32, %arg1: i32) -> (i32, i32) {
    %c0_i32 = arith.constant 0 : i32
    %c0_i32_0 = arith.constant 0 : i32
    %c0_i32_1 = arith.constant 0 : i32
    return %c0_i32, %c0_i32_0 : i32, i32
  }
  func.func @transform_2(%arg0: i32, %arg1: i32) -> (i32, i32, i32) {
    %c0_i32 = arith.constant 0 : i32
    %c0_i32_0 = arith.constant 0 : i32
    return %arg0, %c0_i32, %arg1 : i32, i32, i32
  }
  func.func @transform_3(%arg0: i32, %arg1: i32) -> (i32, i32, i32) {
    %c0_i32 = arith.constant 0 : i32
    %c0_i32_0 = arith.constant 0 : i32
    return %arg0, %c0_i32, %arg1 : i32, i32, i32
  }
}

</mosaic_0001>

<llo_original>
// kernel: convgru_cell.1
$region0: #{convgru_cell.1}
  #allocation0 [shape = 'u32[]', space=smem, size = 0x4, offset = 0x4, fixed_abs, tag = 'smem constant byte address 0x4 - core index']
  #allocation1 [shape = 'u32[144,128]{1,0:T(1,128)}', space=vmem, size = 0x12000, scoped, tag = 'internal scratch']
  %s0 = inlined_call_operand.vmem [shape: f32[2,128,256], index: 0, kind: input, shape index: {}]
  %s1 = inlined_call_operand.vmem [shape: f32[32,128], index: 1, kind: input, shape index: {}]
  %s2 = inlined_call_operand.vmem [shape: f32[2,8,256], index: 2, kind: input, shape index: {}]
  %s3 = inlined_call_operand.vmem [shape: f32[2,8,256], index: 3, kind: output, shape index: {}]
  %s4 = sld [smem:[#allocation0]]
  $region45: #{convgru_cell.1} parent=0
    _
  %s6 = ssub.s32 1, %s4
  %s7 = scalar_select 0, %s6, %s4
  loop: start=0, step=1, limit=4
  $region2: #{convgru_cell.1} parent=0 // loop_pre_header
    _
  $region3: #{convgru_cell.1} parent=0 // loop_header
    %s9 = sphi 0, %s13
    %p10 = scmp.ge.s32.totalorder %s9, 4
    %s16 = sphi 0, %s28
    %s17 = sphi 0, %s24
    %s18 = sphi 0, %s16
    %s19 = sphi 0, %s17
    %s20 = sphi 0, %s18
    %s21 = sphi 0, %s19
    %s33 = sphi 0, %s35
    %s36 = sphi 0, %s33
    %s37 = sphi 0, %s36
    %s53 = sphi 0, %s37
    %s57 = sphi 0, %s57
    %s59 = sphi 0, %s57
    %s60 = sphi 0, %s59
    %s74 = sphi 0, %s60
    %s82 = sphi 0, %s84
    %s85 = sphi 0, %s82
    %s86 = sphi 0, %s85
    %s102 = sphi 0, %s86
    %s110 = sphi 0, %s112
    %s113 = sphi 0, %s110
    %s114 = sphi 0, %s113
    %s130 = sphi 0, %s114
  $region4: #{convgru_cell.1} parent=0 // loop_header_branch
    %12 = sbr.rel (%p10) target = $region8
  $region5: #{convgru_cell.1} parent=0 // loop_body
    %s14 = ssub.s32 %s9, 1
    %s15 = ssub.s32 %s9, 2
    %s22 = sadd.s32 1, %s17
    %p23 = scmp.ge.s32.totalorder %s22, 1
    %s24 = scalar_select %p23, 0, %s22
    %s25 = sadd.s32 1, %s16
    %s26 = scalar_select %p23, %s25, %s16
    %p27 = scmp.ge.s32.totalorder %s26, 2
    %s28 = scalar_select %p27, 0, %s26
    %s29 = ssub.s32 %s16, %s28
    %s30 = ssub.s32 %s17, %s24
    %s31 = sor.u32 %s29, %s30
    %p32 = scmp.eq.s32.totalorder %s31, 0
    %s34 = sadd.s32 %s33, 1
    %s35 = scalar_select %p32, %s33, %s34
    %p38 = pneg %p32
    %p39 = scmp.eq.s32.totalorder %s9, 1
    %p40 = por %p38, %p39
    %p41 = scmp.ne.s32.totalorder %s33, %s36
    %p42 = scmp.eq.s32.totalorder %s9, 0
    %p43 = por %p41, %p42
    %p44 = scmp.ne.s32.totalorder %s33, %s36
    %p45 = scmp.eq.s32.totalorder %s14, 1
    %p46 = por %p44, %p45
    %p47 = scmp.ne.s32.totalorder %s36, %s37
    %p48 = scmp.eq.s32.totalorder %s14, 0
    %p49 = por %p47, %p48
    %p50 = scmp.ne.s32.totalorder %s36, %s37
    %p51 = scmp.eq.s32.totalorder %s15, 1
    %p52 = por %p50, %p51
    %p54 = scmp.ne.s32.totalorder %s37, %s53
    %p55 = scmp.eq.s32.totalorder %s15, 0
    %p56 = por %p54, %p55
    %s58 = sadd.s32 %s57, 1
    %p61 = scmp.eq.s32.totalorder %s9, 1
    %p62 = scmp.ne.s32.totalorder %s57, %s59
    %p63 = scmp.eq.s32.totalorder %s9, 0
    %p64 = por %p62, %p63
    %p65 = scmp.ne.s32.totalorder %s57, %s59
    %p66 = scmp.eq.s32.totalorder %s14, 1
    %p67 = por %p65, %p66
    %p68 = scmp.ne.s32.totalorder %s59, %s60
    %p69 = scmp.eq.s32.totalorder %s14, 0
    %p70 = por %p68, %p69
    %p71 = scmp.ne.s32.totalorder %s59, %s60
    %p72 = scmp.eq.s32.totalorder %s15, 1
    %p73 = por %p71, %p72
    %p75 = scmp.ne.s32.totalorder %s60, %s74
    %p76 = scmp.eq.s32.totalorder %s15, 0
    %p77 = por %p75, %p76
    %s78 = ssub.s32 %s16, %s28
    %s79 = ssub.s32 %s17, %s24
    %s80 = sor.u32 %s78, %s79
    %p81 = scmp.eq.s32.totalorder %s80, 0
    %s83 = sadd.s32 %s82, 1
    %s84 = scalar_select %p81, %s82, %s83
    %p87 = pneg %p81
    %p88 = scmp.eq.s32.totalorder %s9, 1
    %p89 = por %p87, %p88
    %p90 = scmp.ne.s32.totalorder %s82, %s85
    %p91 = scmp.eq.s32.totalorder %s9, 0
    %p92 = por %p90, %p91
    %p93 = scmp.ne.s32.totalorder %s82, %s85
    %p94 = scmp.eq.s32.totalorder %s14, 1
    %p95 = por %p93, %p94
    %p96 = scmp.ne.s32.totalorder %s85, %s86
    %p97 = scmp.eq.s32.totalorder %s14, 0
    %p98 = por %p96, %p97
    %p99 = scmp.ne.s32.totalorder %s85, %s86
    %p100 = scmp.eq.s32.totalorder %s15, 1
    %p101 = por %p99, %p100
    %p103 = scmp.ne.s32.totalorder %s86, %s102
    %p104 = scmp.eq.s32.totalorder %s15, 0
    %p105 = por %p103, %p104
    %s106 = ssub.s32 %s16, %s28
    %s107 = ssub.s32 %s17, %s24
    %s108 = sor.u32 %s106, %s107
    %p109 = scmp.eq.s32.totalorder %s108, 0
    %s111 = sadd.s32 %s110, 1
    %s112 = scalar_select %p109, %s110, %s111
    %p115 = pneg %p109
    %p116 = scmp.eq.s32.totalorder %s9, 1
    %p117 = por %p115, %p116
    %p118 = scmp.ne.s32.totalorder %s110, %s113
    %p119 = scmp.eq.s32.totalorder %s9, 0
    %p120 = por %p118, %p119
    %p121 = scmp.ne.s32.totalorder %s110, %s113
    %p122 = scmp.eq.s32.totalorder %s14, 1
    %p123 = por %p121, %p122
    %p124 = scmp.ne.s32.totalorder %s113, %s114
    %p125 = scmp.eq.s32.totalorder %s14, 0
    %p126 = por %p124, %p125
    %p127 = scmp.ne.s32.totalorder %s113, %s114
    %p128 = scmp.eq.s32.totalorder %s15, 1
    %p129 = por %p127, %p128
    %p131 = scmp.ne.s32.totalorder %s114, %s130
    %p132 = scmp.eq.s32.totalorder %s15, 0
    %p133 = por %p131, %p132
    %p134 = scmp.le.s32.totalorder 1, %s9
    %p135 = scmp.lt.s32.totalorder %s9, 3
    %p136 = pnand %p134, %p135
    %p137 = pneg %p136
    // Predicated region
    $region9: #{convgru_cell.1} parent=5 // pred_check
      _
    $region10: #{convgru_cell.1} parent=5 // pred_check_branch
      %139 = sbr.rel (%p136) target = $region12
    $region11: #{convgru_cell.1} parent=5 // pred_region
      %s140 = ssub.s32 %s9, 1
      // Predicated region
      $region13: #{convgru_cell.1} parent=11 // pred_check
        %p141 = pneg %p70
      $region14: #{convgru_cell.1} parent=11 // pred_check_branch
        %143 = sbr.rel (%p141) target = $region16
      $region15: #{convgru_cell.1} parent=11 // pred_region
        _
      $region16: #{convgru_cell.1} parent=11 // pred_fallthru
        _
    $region12: #{convgru_cell.1} parent=5 // pred_fallthru
      _
    %p144 = scmp.lt.s32.totalorder %s9, 2
    // Predicated region
    $region17: #{convgru_cell.1} parent=5 // pred_check
      %p145 = pneg %p144
    $region18: #{convgru_cell.1} parent=5 // pred_check_branch
      %147 = sbr.rel (%p145) target = $region20
    $region19: #{convgru_cell.1} parent=5 // pred_region
      // Predicated region
      $region21: #{convgru_cell.1} parent=19 // pred_check
        %p148 = pneg %p43
      $region22: #{convgru_cell.1} parent=19 // pred_check_branch
        %150 = sbr.rel (%p148) target = $region24
      $region23: #{convgru_cell.1} parent=19 // pred_region
        %s151 = smul.u32 2, %s17
        %p152 = scmp.lt.s32.totalorder %s16, 1
        %s153 = scalar_select %p152, %s16, 1
        %p154 = scmp.lt.s32.totalorder %s151, 1
        %s155 = scalar_select %p154, %s151, 1
        %s156 = smul.addr %s153, 32
        %s157 = sadd.s32 %s155, %s156
        %s158 = smul.addr %s157, 8
        %s159 = scalar_lea.vmem %s0, %s158
        %s160 = smul.u32 2, %s17
      $region24: #{convgru_cell.1} parent=19 // pred_fallthru
        _
      // Predicated region
      $region25: #{convgru_cell.1} parent=19 // pred_check
        %p161 = pneg %p92
      $region26: #{convgru_cell.1} parent=19 // pred_check_branch
        %163 = sbr.rel (%p161) target = $region28
      $region27: #{convgru_cell.1} parent=19 // pred_region
        %s164 = smul.u32 2, %s17
        %p165 = scmp.lt.s32.totalorder %s16, 1
        %s166 = scalar_select %p165, %s16, 1
        %p167 = scmp.lt.s32.totalorder %s164, 1
        %s168 = scalar_select %p167, %s164, 1
        %s169 = smul.addr %s166, 2
        %s170 = sadd.s32 %s168, %s169
        %s171 = smul.addr %s170, 8
        %s172 = scalar_lea.vmem %s2, %s171
        %s173 = smul.u32 2, %s17
      $region28: #{convgru_cell.1} parent=19 // pred_fallthru
        _
    $region20: #{convgru_cell.1} parent=5 // pred_fallthru
      _
    %p174 = scmp.le.s32.totalorder 1, %s9
    %p175 = scmp.lt.s32.totalorder %s9, 3
    %p176 = pnand %p174, %p175
    %p177 = pneg %p176
    // Predicated region
    $region29: #{convgru_cell.1} parent=5 // pred_check
      _
    $region30: #{convgru_cell.1} parent=5 // pred_check_branch
      %179 = sbr.rel (%p176) target = $region32
    $region31: #{convgru_cell.1} parent=5 // pred_region
      %s180 = ssub.s32 %s9, 1
      %s181 = smul.u32 2, %s19
      %p182 = scmp.lt.s32.totalorder %s18, 1
      %s183 = scalar_select %p182, %s18, 1
      %p184 = scmp.lt.s32.totalorder %s181, 1
      %s185 = scalar_select %p184, %s181, 1
      %s186 = smul.addr %s183, 32
      %s187 = sadd.s32 %s185, %s186
      %s188 = smul.addr %s187, 8
      %s189 = scalar_lea.vmem %s0, %s188
      %p190 = pneg %p49
      %p191 = pneg %p46
      %p192 = pneg %p70
      %p193 = pneg %p67
      %s194 = smul.u32 2, %s19
      %p195 = scmp.lt.s32.totalorder %s18, 1
      %s196 = scalar_select %p195, %s18, 1
      %p197 = scmp.lt.s32.totalorder %s194, 1
      %s198 = scalar_select %p197, %s194, 1
      %s199 = smul.addr %s196, 2
      %s200 = sadd.s32 %s198, %s199
      %s201 = smul.addr %s200, 8
      %s202 = scalar_lea.vmem %s2, %s201
      %p203 = pneg %p98
      %p204 = pneg %p95
      %p205 = pneg %p126
      %p206 = pneg %p123
      %s207 = smul.u32 2, %s19
      %p208 = scmp.lt.s32.totalorder %s18, 1
      %s209 = scalar_select %p208, %s18, 1
      %p210 = scmp.lt.s32.totalorder %s207, 1
      %s211 = scalar_select %p210, %s207, 1
      %s212 = smul.addr %s209, 2
      %s213 = sadd.s32 %s211, %s212
      %s214 = smul.addr %s213, 8
      %s215 = scalar_lea.vmem %s3, %s214
      %s216 = smul.u32 2, %s19
      %p217 = scmp.lt.s32.totalorder %s18, 1
      %s218 = scalar_select %p217, %s18, 1
      %p219 = scmp.lt.s32.totalorder %s216, 1
      %s220 = scalar_select %p219, %s216, 1
      %s221 = smul.addr %s218, 32
      %s222 = sadd.s32 %s220, %s221
      %s223 = smul.addr %s222, 8
      %s224 = scalar_lea.vmem %s0, %s223
      %s225 = smul.u32 2, %s19
      %s226 = smul.u32 2, %s19
      %p227 = scmp.lt.s32.totalorder %s18, 1
      %s228 = scalar_select %p227, %s18, 1
      %p229 = scmp.lt.s32.totalorder %s226, 1
      %s230 = scalar_select %p229, %s226, 1
      %s231 = smul.addr %s228, 2
      %s232 = sadd.s32 %s230, %s231
      %s233 = smul.addr %s232, 8
      %s234 = scalar_lea.vmem %s2, %s233
      %s235 = smul.u32 2, %s19
      %s236 = smul.u32 2, %s19
      %p237 = scmp.lt.s32.totalorder %s18, 1
      %s238 = scalar_select %p237, %s18, 1
      %p239 = scmp.lt.s32.totalorder %s236, 1
      %s240 = scalar_select %p239, %s236, 1
      %s241 = smul.addr %s238, 2
      %s242 = sadd.s32 %s240, %s241
      %s243 = smul.addr %s242, 8
      %s244 = scalar_lea.vmem %s3, %s243
      %s245 = smul.u32 2, %s19
      %v246 = vld [vmem:[%s1] sm:$0xff]
      %v247 = vld [vmem:[%s1 + $0x8] sm:$0xff]
      %v248 = vld [vmem:[%s1 + $0x10] sm:$0xff]
      %v249 = vld [vmem:[%s1 + $0x18] sm:$0xff]
      %v250 = vld [vmem:[%s224] sm:$0xff]
      %v251 = vld [vmem:[%s224 + $0x8] sm:$0xff]
      %v252 = vld [vmem:[%s224 + $0x10] sm:$0xff]
      %v253 = vld [vmem:[%s224 + $0x18] sm:$0xff]
      %v254 = vld [vmem:[%s224 + $0x20] sm:$0xff]
      %v255 = vld [vmem:[%s224 + $0x28] sm:$0xff]
      %v256 = vld [vmem:[%s224 + $0x30] sm:$0xff]
      %v257 = vld [vmem:[%s224 + $0x38] sm:$0xff]
      %v258 = vld [vmem:[%s224 + $0x40] sm:$0xff]
      %v259 = vld [vmem:[%s224 + $0x48] sm:$0xff]
      %v260 = vld [vmem:[%s224 + $0x50] sm:$0xff]
      %v261 = vld [vmem:[%s224 + $0x58] sm:$0xff]
      %v262 = vld [vmem:[%s224 + $0x60] sm:$0xff]
      %v263 = vld [vmem:[%s224 + $0x68] sm:$0xff]
      %v264 = vld [vmem:[%s224 + $0x70] sm:$0xff]
      %v265 = vld [vmem:[%s224 + $0x78] sm:$0xff]
      %v266 = vld [vmem:[%s224 + $0x80] sm:$0xff]
      %v267 = vld [vmem:[%s224 + $0x88] sm:$0xff]
      %v268 = vld [vmem:[%s224 + $0x90] sm:$0xff]
      %v269 = vld [vmem:[%s224 + $0x98] sm:$0xff]
      %v270 = vld [vmem:[%s224 + $0xa0] sm:$0xff]
      %v271 = vld [vmem:[%s224 + $0xa8] sm:$0xff]
      %v272 = vld [vmem:[%s224 + $0xb0] sm:$0xff]
      %v273 = vld [vmem:[%s224 + $0xb8] sm:$0xff]
      %v274 = vld [vmem:[%s224 + $0xc0] sm:$0xff]
      %v275 = vld [vmem:[%s224 + $0xc8] sm:$0xff]
      %v276 = vld [vmem:[%s224 + $0xd0] sm:$0xff]
      %v277 = vld [vmem:[%s224 + $0xd8] sm:$0xff]
      %v278 = vld [vmem:[%s224 + $0xe0] sm:$0xff]
      %v279 = vld [vmem:[%s224 + $0xe8] sm:$0xff]
      %v280 = vld [vmem:[%s224 + $0xf0] sm:$0xff]
      %v281 = vld [vmem:[%s224 + $0xf8] sm:$0xff]
      %282 = vmatprep.subr.mxu0 %v281
      %283 = vmatpush1.msra.mxu0 %v280
      %284 = vmatprep.subr.mxu0 %v279
      %285 = vmatpush1.msra.mxu0 %v278
      %286 = vmatprep.subr.mxu0 %v277
      %287 = vmatpush1.msra.mxu0 %v276
      %288 = vmatprep.subr.mxu0 %v275
      %289 = vmatpush1.msra.mxu0 %v274
      %290 = vmatprep.subr.mxu0 %v273
      %291 = vmatpush1.msra.mxu0 %v272
      %292 = vmatprep.subr.mxu0 %v271
      %293 = vmatpush1.msra.mxu0 %v270
      %294 = vmatprep.subr.mxu0 %v269
      %295 = vmatpush1.msra.mxu0 %v268
      %296 = vmatprep.subr.mxu0 %v267
      %297 = vmatpush1.msra.mxu0 %v266
      %298 = vmatprep.subr.mxu0 %v265
      %299 = vmatpush1.msra.mxu0 %v264
      %300 = vmatprep.subr.mxu0 %v263
      %301 = vmatpush1.msra.mxu0 %v262
      %302 = vmatprep.subr.mxu0 %v261
      %303 = vmatpush1.msra.mxu0 %v260
      %304 = vmatprep.subr.mxu0 %v259
      %305 = vmatpush1.msra.mxu0 %v258
      %306 = vmatprep.subr.mxu0 %v257
      %307 = vmatpush1.msra.mxu0 %v256
      %308 = vmatprep.subr.mxu0 %v255
      %309 = vmatpush1.msra.mxu0 %v254
      %310 = vmatprep.subr.mxu0 %v253
      %311 = vmatpush1.msra.mxu0 %v252
      %312 = vmatprep.subr.mxu0 %v251
      %313 = vmatpush1.msra.mxu0 %v250
      %314 = vmatprep.subr.mxu0 0.0
      %315 = vmatpush2.msra.mxu0 0.0
      %316 = vmatprep.subr.mxu0 0.0
      %317 = vmatpush2.msra.mxu0 0.0
      %318 = vmatprep.subr.mxu0 0.0
      %319 = vmatpush2.msra.mxu0 0.0
      %320 = vmatprep.subr.mxu0 0.0
      %321 = vmatpush2.msra.mxu0 0.0
      %322 = vmatprep.subr.mxu0 0.0
      %323 = vmatpush2.msra.mxu0 0.0
      %324 = vmatprep.subr.mxu0 0.0
      %325 = vmatpush2.msra.mxu0 0.0
      %326 = vmatprep.subr.mxu0 0.0
      %327 = vmatpush2.msra.mxu0 0.0
      %328 = vmatprep.subr.mxu0 0.0
      %329 = vmatpush2.msra.mxu0 0.0
      %330 = vmatprep.subr.mxu0 0.0
      %331 = vmatpush2.msra.mxu0 0.0
      %332 = vmatprep.subr.mxu0 0.0
      %333 = vmatpush2.msra.mxu0 0.0
      %334 = vmatprep.subr.mxu0 0.0
      %335 = vmatpush2.msra.mxu0 0.0
      %336 = vmatprep.subr.mxu0 0.0
      %337 = vmatpush2.msra.mxu0 0.0
      %338 = vmatprep.subr.mxu0 0.0
      %339 = vmatpush2.msra.mxu0 0.0
      %340 = vmatprep.subr.mxu0 0.0
      %341 = vmatpush2.msra.mxu0 0.0
      %342 = vmatprep.subr.mxu0 0.0
      %343 = vmatpush2.msra.mxu0 0.0
      %344 = vmatprep.subr.mxu0 0.0
      %345 = vmatpush2.msra.mxu0 0.0
      %346 = vmatprep.mubr.f32.mxu0 0.0
      %347 = vmatmul.mubr.f32.gmra.mxu0 %v246
      %v348 = vpop.f32.mrf.mxu0
      %v349 = vadd.f32 0.0, %v348
      %v350 = vpop.f32.mrf.mxu0
      %v351 = vadd.f32 0.0, %v350
      %352 = vmatprep.mubr.f32.mxu0 0.0
      %353 = vmatmul.mubr.f32.gmra.mxu0 %v247
      %v354 = vpop.f32.mrf.mxu0
      %v355 = vadd.f32 0.0, %v354
      %v356 = vpop.f32.mrf.mxu0
      %v357 = vadd.f32 0.0, %v356
      %358 = vmatprep.mubr.f32.mxu0 0.0
      %359 = vmatmul.mubr.f32.gmra.mxu0 %v248
      %v360 = vpop.f32.mrf.mxu0
      %v361 = vadd.f32 0.0, %v360
      %v362 = vpop.f32.mrf.mxu0
      %v363 = vadd.f32 0.0, %v362
      %364 = vmatprep.mubr.f32.mxu0 0.0
      %365 = vmatmul.mubr.f32.gmra.mxu0 %v249
      %v366 = vpop.f32.mrf.mxu0
      %v367 = vadd.f32 0.0, %v366
      %v368 = vpop.f32.mrf.mxu0
      %v369 = vadd.f32 0.0, %v368
      %370 = vdwg.mxu0
      %v371 = vxor.u32 %v349, 2147483648
      %v372 = vxor.u32 %v351, 2147483648
      %v373 = vmul.f32 %v371, 1.442695
      %v374 = vpow.pop %v373
      %v375 = vmul.f32 %v372, 1.442695
      %v376 = vpow.pop %v375
      %v377 = vadd.f32 %v374, 1.0
      %v378 = vadd.f32 %v376, 1.0
      %v379 = vrcp.pop %v377
      %v380 = vmul.f32 1.0, %v379
      %v381 = vrcp.pop %v378
      %v382 = vmul.f32 1.0, %v381
      %v383 = vxor.u32 %v355, 2147483648
      %v384 = vxor.u32 %v357, 2147483648
      %v385 = vmul.f32 %v383, 1.442695
      %v386 = vpow.pop %v385
      %v387 = vmul.f32 %v384, 1.442695
      %v388 = vpow.pop %v387
      %v389 = vadd.f32 %v386, 1.0
      %v390 = vadd.f32 %v388, 1.0
      %v391 = vrcp.pop %v389
      %v392 = vmul.f32 1.0, %v391
      %v393 = vrcp.pop %v390
      %v394 = vmul.f32 1.0, %v393
      %v395 = vmul.f32 %v380, %v367
      %v396 = vmul.f32 %v382, %v369
      %v397 = vadd.f32 %v361, %v395
      %v398 = vadd.f32 %v363, %v396
      %v399 = vtanh.pop %v397
      %v400 = vtanh.pop %v398
      %v401 = vsub.f32 1.0, %v392
      %v402 = vsub.f32 1.0, %v394
      %v403 = vmul.f32 %v401, %v399
      %v404 = vmul.f32 %v402, %v400
      %v405 = vld [vmem:[%s234] sm:$0xff]
      %v406 = vld [vmem:[%s234 + $0x8] sm:$0xff]
      %v407 = vmul.f32 %v392, %v405
      %v408 = vmul.f32 %v394, %v406
      %v409 = vadd.f32 %v403, %v407
      %v410 = vadd.f32 %v404, %v408
      %411 = vst [vmem:[%s244] sm:$0xff] %v409
      %412 = vst [vmem:[%s244 + $0x8] sm:$0xff] %v410
      %s413 = smul.u32 2, %s19
      %p414 = scmp.lt.s32.totalorder %s18, 1
      %s415 = scalar_select %p414, %s18, 1
      %p416 = scmp.lt.s32.totalorder %s413, 1
      %s417 = scalar_select %p416, %s413, 1
      %s418 = smul.addr %s415, 2
      %s419 = sadd.s32 %s417, %s418
      %s420 = smul.addr %s419, 8
      %s421 = scalar_lea.vmem %s3, %s420
      // Predicated region
      $region33: #{convgru_cell.1} parent=31 // pred_check
        %p422 = pneg %p123
      $region34: #{convgru_cell.1} parent=31 // pred_check_branch
        %424 = sbr.rel (%p422) target = $region36
      $region35: #{convgru_cell.1} parent=31 // pred_region
        %s425 = smul.u32 2, %s19
      $region36: #{convgru_cell.1} parent=31 // pred_fallthru
        _
    $region32: #{convgru_cell.1} parent=5 // pred_fallthru
      _
    %p426 = scmp.le.s32.totalorder 2, %s9
    // Predicated region
    $region37: #{convgru_cell.1} parent=5 // pred_check
      %p427 = pneg %p426
    $region38: #{convgru_cell.1} parent=5 // pred_check_branch
      %429 = sbr.rel (%p427) target = $region40
    $region39: #{convgru_cell.1} parent=5 // pred_region
      %s430 = ssub.s32 %s9, 2
      // Predicated region
      $region41: #{convgru_cell.1} parent=39 // pred_check
        %p431 = pneg %p129
      $region42: #{convgru_cell.1} parent=39 // pred_check_branch
        %433 = sbr.rel (%p431) target = $region44
      $region43: #{convgru_cell.1} parent=39 // pred_region
        %s434 = smul.u32 2, %s21
        %p435 = scmp.lt.s32.totalorder %s20, 1
        %s436 = scalar_select %p435, %s20, 1
        %p437 = scmp.lt.s32.totalorder %s434, 1
        %s438 = scalar_select %p437, %s434, 1
        %s439 = smul.addr %s436, 2
        %s440 = sadd.s32 %s438, %s439
        %s441 = smul.addr %s440, 8
        %s442 = scalar_lea.vmem %s3, %s441
      $region44: #{convgru_cell.1} parent=39 // pred_fallthru
        _
    $region40: #{convgru_cell.1} parent=5 // pred_fallthru
      _
  $region6: #{convgru_cell.1} parent=0 // loop_footer
    %s13 = sadd.s32 1, %s9
  $region7: #{convgru_cell.1} parent=0 // loop_footer_branch
    %8 = sbr.rel target = $region3
  $region8: #{convgru_cell.1} parent=0 // loop_exit
    _

</llo_original>
